<compile_context>
chip_gen: v5e
topology: v5e:2x2
jax: 0.10.0
libtpu: 0.0.40
codegen_flags: <defaults>
</compile_context>

<pallas_src>
import functools
import inspect

import jax
import jax.numpy as jnp
from jax import lax
from jax.experimental import pallas as pl
from jax.experimental.pallas import tpu as pltpu

_LANE = 128
_SUBLANE = 8

try:
    _BLOCKSPEC_HAS_PIPELINE_MODE = (
        "pipeline_mode" in inspect.signature(pl.BlockSpec).parameters)
except (TypeError, ValueError):  # pragma: no cover - defensive
    _BLOCKSPEC_HAS_PIPELINE_MODE = True


def _relation_head_kernel(a_ref, b_ref, w1_ref, b1_ref, w2_ref, b2_ref,
                          out_ref, acc_a_ref, acc_b_ref,
                          *, inv_s, hidden, chunk, compute_dtype):
    # NOTE: this init/finalize-on-token-step pattern is only correct because
    # the token (reduction) axis is the LAST grid axis.
    s = pl.program_id(1)

    @pl.when(s == 0)
    def _init():
        acc_a_ref[...] = jnp.zeros_like(acc_a_ref)
        acc_b_ref[...] = jnp.zeros_like(acc_b_ref)

    ts = a_ref.shape[1]

    def _accumulate(src_ref, acc_ref):
        # Strip-mined f32 widening + token reduce: bounds the live f32 temp to
        # ~(tb, chunk, H) instead of the whole (tb, ts, H) tile.
        nfull = ts // chunk
        rem = ts - nfull * chunk

        def body(c, carry):
            start = pl.multiple_of(c * chunk, chunk)
            acc_ref[...] += jnp.sum(
                src_ref[:, pl.ds(start, chunk), :].astype(jnp.float32), axis=1)
            return carry

        lax.fori_loop(0, nfull, body, 0, unroll=False)
        if rem > 0:
            acc_ref[...] += jnp.sum(
                src_ref[:, pl.ds(nfull * chunk, rem), :].astype(jnp.float32),
                axis=1)

    _accumulate(a_ref, acc_a_ref)
    _accumulate(b_ref, acc_b_ref)

    @pl.when(s == pl.num_programs(1) - 1)
    def _finalize():
        pool_code = acc_a_ref[...] * inv_s          # (tb, H)  mean over tokens
        pool_text = acc_b_ref[...] * inv_s
        diff = jnp.abs(pool_code - pool_text)
        # dropout -> identity (inference)
        pc = pool_code.astype(compute_dtype)
        pt = pool_text.astype(compute_dtype)
        df = diff.astype(compute_dtype)
        H = hidden
        # concat([pc, pt, df]) @ W1  ==  three K=H dots on static W1 slices.
        h = (jnp.dot(pc, w1_ref[0:H, :], preferred_element_type=jnp.float32)
             + jnp.dot(pt, w1_ref[H:2 * H, :], preferred_element_type=jnp.float32)
             + jnp.dot(df, w1_ref[2 * H:3 * H, :], preferred_element_type=jnp.float32)
             + b1_ref[...])
        h = jnp.tanh(h)
        # dropout -> identity (inference)
        logits = (jnp.dot(h.astype(compute_dtype), w2_ref[...],
                          preferred_element_type=jnp.float32)
                  + b2_ref[...])
        out_ref[...] = logits.astype(out_ref.dtype)


def relation_classify_header(a_hidden, b_hidden, params, *, out_classes=2,
                             compute_dtype=jnp.bfloat16, stream_dtype=None,
                             token_tile=None):
    """a_hidden, b_hidden: (B, S, H) last-hidden-state tensors (== the
    PyTorch module's `a_hidden[0]` / `b_hidden[0]`). Returns (B, out_classes)
    f32 logits."""
    B, S, H = a_hidden.shape
    assert b_hidden.shape == (B, S, H)

    if stream_dtype is not None:
        # Kernel is HBM-bound: optionally stream the hidden states in bf16
        # (f32 scratch accumulation keeps the mean pool numerically benign).
        a_hidden = a_hidden.astype(stream_dtype)
        b_hidden = b_hidden.astype(stream_dtype)

    n_pad = _LANE
    # PyTorch (out, in) weights -> (in, out) MXU layout. W1/W2 in bf16 (native
    # MXU path, half the resident VMEM); tiny biases stay f32.
    w1 = params["dense_w"].T.astype(compute_dtype)                     # (3H, H)
    b1 = params["dense_b"].reshape(1, H).astype(jnp.float32)           # (1, H)
    w2 = jnp.zeros((H, n_pad), compute_dtype).at[:, :out_classes].set(
        params["out_w"].T.astype(compute_dtype))                       # (H, 128)
    b2 = jnp.zeros((1, n_pad), jnp.float32).at[:, :out_classes].set(
        params["out_b"].reshape(1, out_classes).astype(jnp.float32))   # (1, 128)

    itemsize = int(jnp.dtype(a_hidden.dtype).itemsize)
    # Packed sub-32-bit dtypes need 16 (bf16) / 32 (int8, fp8) sublane rows.
    sub_mult = _SUBLANE * max(1, 4 // itemsize)

    try:
        vmem_cap = int(pltpu.get_tpu_info().vmem_capacity_bytes)
    except Exception:
        vmem_cap = 64 << 20   # conservative (v7x-sized) fallback

    # Batch tile: keep tb small (<= 8) and spend the byte budget on ts instead
    # (each DMA is tb strided segments of ts*H contiguous bytes).
    tb = B if B <= _SUBLANE else _SUBLANE

    # Token tile: ~vmem_cap/16 bytes per streamed input buffer, i.e. 2 inputs x
    # 2 pipeline buffers ~= vmem_cap/4 of streaming VMEM (8 MiB tiles on
    # 128 MiB v5e/v6e, 4 MiB tiles on 64 MiB v7x).
    if token_tile is not None:
        assert token_tile == S or token_tile % sub_mult == 0
        ts = min(S, token_tile)
    else:
        budget = vmem_cap // 16
        ts = min(S, max(sub_mult, budget // max(1, tb * H * itemsize)))
    if ts < S:
        ts = max(sub_mult, (ts // sub_mult) * sub_mult)

    b_pad = pl.cdiv(B, tb) * tb
    s_pad = pl.cdiv(S, ts) * ts
    if (b_pad, s_pad) != (B, S):
        # Zero padding along S is exact (sum-then-scale by 1/S_true); padded
        # batch rows are sliced away below.
        pads = ((0, b_pad - B), (0, s_pad - S), (0, 0))
        a_hidden = jnp.pad(a_hidden, pads)
        b_hidden = jnp.pad(b_hidden, pads)

    # Token (reduction) axis MUST remain the last grid axis (kernel keys its
    # accumulator init/finalize off pl.program_id(1)).
    grid = (b_pad // tb, s_pad // ts)
    assert len(grid) == 2

    # Strip-mine chunk: bound the in-kernel f32 widened temp to ~2 MiB.
    chunk_rows = (2 << 20) // max(1, tb * H * 4)
    chunk = min(ts, max(sub_mult, (chunk_rows // sub_mult) * sub_mult))

    kernel = functools.partial(_relation_head_kernel, inv_s=1.0 / S, hidden=H,
                               chunk=chunk, compute_dtype=compute_dtype)

    w_bytes = int(w1.size * w1.dtype.itemsize + w2.size * w2.dtype.itemsize
                  + b1.size * 4 + b2.size * 4)
    bytes_in = 2 * b_pad * s_pad * H * itemsize
    cost = pl.CostEstimate(
        flops=int(2 * b_pad * s_pad * H
                  + 2 * b_pad * (3 * H) * H + 2 * b_pad * H * n_pad),
        transcendentals=int(b_pad * H),
        bytes_accessed=int(bytes_in + w_bytes + b_pad * n_pad * 4),
    )

    vmem_need = (2 * 2 * tb * ts * H * itemsize   # double-buffered input tiles
                 + 2 * w_bytes                    # weights (headroom if 2-buf)
                 + 2 * tb * n_pad * 4             # output block
                 + 2 * tb * H * 4                 # f32 pooling accumulators
                 + tb * chunk * H * 4)            # strip-mined f32 temp
    vmem_limit_cap = min(100 << 20, (vmem_cap * 3) // 4)   # 96 MiB / 48 MiB
    vmem_limit = int(min(max(vmem_need * 5 // 4 + (2 << 20), 16 << 20),
                         vmem_limit_cap))

    in_stream_spec = pl.BlockSpec((tb, ts, H), lambda bi, si: (bi, si, 0))

    def _const_spec(shape, single_buffer):
        idx = lambda bi, si: (0,) * len(shape)
        if single_buffer:
            # Constant index_map -> fetched once; one buffer is enough.
            return pl.BlockSpec(shape, idx, pipeline_mode=pl.Buffered(1))
        return pl.BlockSpec(shape, idx)

    def _run(single_buffer_weights):
        grid_spec = pltpu.PrefetchScalarGridSpec(
            num_scalar_prefetch=0,
            grid=grid,
            in_specs=[
                in_stream_spec,                                        # a_hidden
                in_stream_spec,                                        # b_hidden
                _const_spec((3 * H, H), single_buffer_weights),        # W1
                _const_spec((1, H), single_buffer_weights),            # b1
                _const_spec((H, n_pad), single_buffer_weights),        # W2 (padded)
                _const_spec((1, n_pad), single_buffer_weights),        # b2 (padded)
            ],
            out_specs=pl.BlockSpec((tb, n_pad), lambda bi, si: (bi, 0)),
            scratch_shapes=[
                pltpu.VMEM((tb, H), jnp.float32),   # sum(a) accumulator
                pltpu.VMEM((tb, H), jnp.float32),   # sum(b) accumulator
            ],
        )
        return pl.pallas_call(
            kernel,
            out_shape=jax.ShapeDtypeStruct((b_pad, n_pad), jnp.float32),
            grid_spec=grid_spec,
            compiler_params=pltpu.CompilerParams(
                dimension_semantics=("parallel", "arbitrary"),
                vmem_limit_bytes=vmem_limit,
            ),
            cost_estimate=cost,
        )(a_hidden, b_hidden, w1, b1, w2, b2)

    single_buffer_ok = _BLOCKSPEC_HAS_PIPELINE_MODE and hasattr(pl, "Buffered")
    if single_buffer_ok:
        try:
            out_padded = _run(True)
        except Exception:
            # pipeline_mode=pl.Buffered(1) not supported by this JAX/Mosaic:
            # fall back to the default (double-buffered) constant specs.
            out_padded = _run(False)
    else:
        out_padded = _run(False)

    return out_padded[:B, :out_classes]


def init_params(key, hidden_size, out_classes=2, scale=0.5):
    """Deterministic synthetic parameters matching the PyTorch module layout."""
    H = hidden_size
    k1, k2, k3, k4 = jax.random.split(key, 4)
    return {
        "dense_w": jax.random.normal(k1, (H, 3 * H), jnp.float32) * scale,  # (out, in)
        "dense_b": jax.random.normal(k2, (H,), jnp.float32) * scale,
        "out_w": jax.random.normal(k3, (out_classes, H), jnp.float32) * scale,
        "out_b": jax.random.normal(k4, (out_classes,), jnp.float32) * scale,
    }


def reference_forward(a_hidden, b_hidden, params):
    """Pure-JAX f32 reference of the PyTorch forward (eval mode)."""
    pa = jnp.mean(a_hidden.astype(jnp.float32), axis=1)
    pb = jnp.mean(b_hidden.astype(jnp.float32), axis=1)
    d = jnp.abs(pa - pb)
    x = jnp.concatenate([pa, pb, d], axis=1)
    h = jnp.tanh(x @ params["dense_w"].T + params["dense_b"])
    return h @ params["out_w"].T + params["out_b"]


if __name__ == "__main__":
    key = jax.random.PRNGKey(0)
    ka, kb, kp, k2 = jax.random.split(key, 4)

    # Test 1: small shape implied by the module (B, S, H) = (2, 8, 32);
    # f32 streaming, bf16 weights/feature path.
    B, S, H = 2, 8, 32
    a_hidden = jax.random.normal(ka, (B, S, H), jnp.float32)
    b_hidden = jax.random.normal(kb, (B, S, H), jnp.float32)
    params = init_params(kp, H)

    out = jax.block_until_ready(
        relation_classify_header(a_hidden, b_hidden, params))
    ref = reference_forward(a_hidden, b_hidden, params)
    assert out.shape == (B, 2), out.shape
    assert jnp.allclose(out, ref, atol=2e-2, rtol=2e-2), (out, ref)

    # Test 2: exercises batch tiling + padding (B=10 -> tb=8), multi-step token
    # accumulation + token padding (S=56, ts=16), and bf16 input streaming.
    B2, S2, H2 = 10, 56, 128
    ka2, kb2, kp2 = jax.random.split(k2, 3)
    a2 = jax.random.normal(ka2, (B2, S2, H2), jnp.float32)
    b2 = jax.random.normal(kb2, (B2, S2, H2), jnp.float32)
    params2 = init_params(kp2, H2)
    out2 = jax.block_until_ready(
        relation_classify_header(a2, b2, params2,
                                 stream_dtype=jnp.bfloat16, token_tile=16))
    ref2 = reference_forward(a2, b2, params2)
    assert out2.shape == (B2, 2), out2.shape
    assert jnp.allclose(out2, ref2, atol=5e-2, rtol=5e-2), (out2, ref2)

    print("KERNEL_OK")
</pallas_src>

<mosaic_0001>
module attributes {stable_mosaic.version = 11 : i64} {
  func.func @_relation_head_kernel(%arg0: i32, %arg1: i32, %arg2: memref<2x8x32xf32, #tpu.memory_space<vmem>>, %arg3: memref<2x8x32xf32, #tpu.memory_space<vmem>>, %arg4: memref<96x32xbf16, #tpu.memory_space<vmem>>, %arg5: memref<1x32xf32, #tpu.memory_space<vmem>>, %arg6: memref<32x128xbf16, #tpu.memory_space<vmem>>, %arg7: memref<1x128xf32, #tpu.memory_space<vmem>>, %arg8: memref<2x128xf32, #tpu.memory_space<vmem>>, %arg9: memref<2x32xf32, #tpu.memory_space<vmem>>, %arg10: memref<2x32xf32, #tpu.memory_space<vmem>>) attributes {dimension_semantics = [#tpu.dimension_semantics<parallel>, #tpu.dimension_semantics<arbitrary>], iteration_bounds = array<i64: 1, 1>, scalar_prefetch = 0 : i64, scratch_operands = 2 : i64, tpu.core_type = #tpu.core_type<tc>, window_params = [{transform_indices = @transform_0, window_bounds = array<i64: 2, 8, 32>}, {transform_indices = @transform_1, window_bounds = array<i64: 2, 8, 32>}, {pipeline_mode = #tpu.pipeline_mode<synchronous>, transform_indices = @transform_2, window_bounds = array<i64: 96, 32>}, {pipeline_mode = #tpu.pipeline_mode<synchronous>, transform_indices = @transform_3, window_bounds = array<i64: 1, 32>}, {pipeline_mode = #tpu.pipeline_mode<synchronous>, transform_indices = @transform_4, window_bounds = array<i64: 32, 128>}, {pipeline_mode = #tpu.pipeline_mode<synchronous>, transform_indices = @transform_5, window_bounds = array<i64: 1, 128>}, {transform_indices = @transform_6, window_bounds = array<i64: 2, 128>}]} {
    %c0_i32 = arith.constant 0 : i32
    %0 = arith.cmpi eq, %arg1, %c0_i32 : i32
    %1 = arith.extui %0 : i1 to i32
    %c0_i32_0 = arith.constant 0 : i32
    %2 = arith.cmpi ne, %1, %c0_i32_0 : i32
    scf.if %2 {
      %cst_19 = arith.constant 0.000000e+00 : f32
      %22 = vector.broadcast %cst_19 : f32 to vector<2x32xf32>
      %c0_20 = arith.constant 0 : index
      %c0_21 = arith.constant 0 : index
      %23 = vector.load %arg9[%c0_20, %c0_21] : memref<2x32xf32, #tpu.memory_space<vmem>>, vector<2x32xf32>
      tpu.vector_store %arg9[%c0_20, %c0_21], %22 {strides = array<i32>} : memref<2x32xf32, #tpu.memory_space<vmem>>, vector<2x32xf32>,
      %cst_22 = arith.constant 0.000000e+00 : f32
      %24 = vector.broadcast %cst_22 : f32 to vector<2x32xf32>
      %c0_23 = arith.constant 0 : index
      %c0_24 = arith.constant 0 : index
      %25 = vector.load %arg10[%c0_23, %c0_24] : memref<2x32xf32, #tpu.memory_space<vmem>>, vector<2x32xf32>
      tpu.vector_store %arg10[%c0_23, %c0_24], %24 {strides = array<i32>} : memref<2x32xf32, #tpu.memory_space<vmem>>, vector<2x32xf32>,
    } else {
    }
    %c0_i32_1 = arith.constant 0 : i32
    %c8_i32 = arith.constant 8 : i32
    %3 = arith.muli %c0_i32_1, %c8_i32 : i32
    %4 = tpu.assume_multiple %3, 8 : i32
    %c0 = arith.constant 0 : index
    %c0_2 = arith.constant 0 : index
    %5 = vector.load %arg9[%c0, %c0_2] : memref<2x32xf32, #tpu.memory_space<vmem>>, vector<2x32xf32>
    %c0_3 = arith.constant 0 : index
    %6 = arith.index_cast %4 : i32 to index
    %c0_4 = arith.constant 0 : index
    %7 = vector.load %arg2[%c0_3, %6, %c0_4] : memref<2x8x32xf32, #tpu.memory_space<vmem>>, vector<2x8x32xf32>
    %cst = arith.constant dense<0.000000e+00> : vector<2x32xf32>
    %8 = vector.multi_reduction <add>, %7, %cst [1] : vector<2x8x32xf32> to vector<2x32xf32>
    %9 = arith.addf %5, %8 : vector<2x32xf32>
    %c0_5 = arith.constant 0 : index
    %c0_6 = arith.constant 0 : index
    %10 = vector.load %arg9[%c0_5, %c0_6] : memref<2x32xf32, #tpu.memory_space<vmem>>, vector<2x32xf32>
    tpu.vector_store %arg9[%c0_5, %c0_6], %9 {strides = array<i32>} : memref<2x32xf32, #tpu.memory_space<vmem>>, vector<2x32xf32>,
    %c1_i32 = arith.constant 1 : i32
    %c0_i32_7 = arith.constant 0 : i32
    %c8_i32_8 = arith.constant 8 : i32
    %11 = arith.muli %c0_i32_7, %c8_i32_8 : i32
    %12 = tpu.assume_multiple %11, 8 : i32
    %c0_9 = arith.constant 0 : index
    %c0_10 = arith.constant 0 : index
    %13 = vector.load %arg10[%c0_9, %c0_10] : memref<2x32xf32, #tpu.memory_space<vmem>>, vector<2x32xf32>
    %c0_11 = arith.constant 0 : index
    %14 = arith.index_cast %12 : i32 to index
    %c0_12 = arith.constant 0 : index
    %15 = vector.load %arg3[%c0_11, %14, %c0_12] : memref<2x8x32xf32, #tpu.memory_space<vmem>>, vector<2x8x32xf32>
    %cst_13 = arith.constant dense<0.000000e+00> : vector<2x32xf32>
    %16 = vector.multi_reduction <add>, %15, %cst_13 [1] : vector<2x8x32xf32> to vector<2x32xf32>
    %17 = arith.addf %13, %16 : vector<2x32xf32>
    %c0_14 = arith.constant 0 : index
    %c0_15 = arith.constant 0 : index
    %18 = vector.load %arg10[%c0_14, %c0_15] : memref<2x32xf32, #tpu.memory_space<vmem>>, vector<2x32xf32>
    tpu.vector_store %arg10[%c0_14, %c0_15], %17 {strides = array<i32>} : memref<2x32xf32, #tpu.memory_space<vmem>>, vector<2x32xf32>,
    %c1_i32_16 = arith.constant 1 : i32
    %c0_i32_17 = arith.constant 0 : i32
    %19 = arith.cmpi eq, %arg1, %c0_i32_17 : i32
    %20 = arith.extui %19 : i1 to i32
    %c0_i32_18 = arith.constant 0 : i32
    %21 = arith.cmpi ne, %20, %c0_i32_18 : i32
    scf.if %21 {
      %c0_19 = arith.constant 0 : index
      %c0_20 = arith.constant 0 : index
      %22 = vector.load %arg9[%c0_19, %c0_20] : memref<2x32xf32, #tpu.memory_space<vmem>>, vector<2x32xf32>
      %cst_21 = arith.constant 1.250000e-01 : f32
      %23 = vector.broadcast %cst_21 : f32 to vector<2x32xf32>
      %24 = arith.mulf %22, %23 : vector<2x32xf32>
      %c0_22 = arith.constant 0 : index
      %c0_23 = arith.constant 0 : index
      %25 = vector.load %arg10[%c0_22, %c0_23] : memref<2x32xf32, #tpu.memory_space<vmem>>, vector<2x32xf32>
      %cst_24 = arith.constant 1.250000e-01 : f32
      %26 = vector.broadcast %cst_24 : f32 to vector<2x32xf32>
      %27 = arith.mulf %25, %26 : vector<2x32xf32>
      %28 = arith.subf %24, %27 : vector<2x32xf32>
      %29 = math.absf %28 : vector<2x32xf32>
      %30 = arith.truncf %24 : vector<2x32xf32> to vector<2x32xbf16>
      %31 = arith.truncf %27 : vector<2x32xf32> to vector<2x32xbf16>
      %32 = arith.truncf %29 : vector<2x32xf32> to vector<2x32xbf16>
      %c0_25 = arith.constant 0 : index
      %c0_26 = arith.constant 0 : index
      %33 = vector.load %arg4[%c0_25, %c0_26] : memref<96x32xbf16, #tpu.memory_space<vmem>>, vector<32x32xbf16>
      %cst_27 = arith.constant dense<0.000000e+00> : vector<2x32xf32>
      %34 = tpu.matmul %30, %33, %cst_27 {dimension_numbers = #tpu.dot_dimension_numbers<[1], [0], [0], [1], [0, 0, 1, 1], [], []>} : vector<2x32xbf16>, vector<32x32xbf16>, vector<2x32xf32> -> vector<2x32xf32>
      %c32 = arith.constant 32 : index
      %c0_28 = arith.constant 0 : index
      %35 = vector.load %arg4[%c32, %c0_28] : memref<96x32xbf16, #tpu.memory_space<vmem>>, vector<32x32xbf16>
      %cst_29 = arith.constant dense<0.000000e+00> : vector<2x32xf32>
      %36 = tpu.matmul %31, %35, %cst_29 {dimension_numbers = #tpu.dot_dimension_numbers<[1], [0], [0], [1], [0, 0, 1, 1], [], []>} : vector<2x32xbf16>, vector<32x32xbf16>, vector<2x32xf32> -> vector<2x32xf32>
      %37 = arith.addf %34, %36 : vector<2x32xf32>
      %c64 = arith.constant 64 : index
      %c0_30 = arith.constant 0 : index
      %38 = vector.load %arg4[%c64, %c0_30] : memref<96x32xbf16, #tpu.memory_space<vmem>>, vector<32x32xbf16>
      %cst_31 = arith.constant dense<0.000000e+00> : vector<2x32xf32>
      %39 = tpu.matmul %32, %38, %cst_31 {dimension_numbers = #tpu.dot_dimension_numbers<[1], [0], [0], [1], [0, 0, 1, 1], [], []>} : vector<2x32xbf16>, vector<32x32xbf16>, vector<2x32xf32> -> vector<2x32xf32>
      %40 = arith.addf %37, %39 : vector<2x32xf32>
      %c0_32 = arith.constant 0 : index
      %c0_33 = arith.constant 0 : index
      %41 = vector.load %arg5[%c0_32, %c0_33] : memref<1x32xf32, #tpu.memory_space<vmem>>, vector<1x32xf32>
      %42 = vector.broadcast %41 : vector<1x32xf32> to vector<2x32xf32>
      %43 = arith.addf %40, %42 : vector<2x32xf32>
      %44 = math.tanh %43 : vector<2x32xf32>
      %45 = arith.truncf %44 : vector<2x32xf32> to vector<2x32xbf16>
      %c0_34 = arith.constant 0 : index
      %c0_35 = arith.constant 0 : index
      %46 = vector.load %arg6[%c0_34, %c0_35] : memref<32x128xbf16, #tpu.memory_space<vmem>>, vector<32x128xbf16>
      %cst_36 = arith.constant dense<0.000000e+00> : vector<2x128xf32>
      %47 = tpu.matmul %45, %46, %cst_36 {dimension_numbers = #tpu.dot_dimension_numbers<[1], [0], [0], [1], [0, 0, 1, 1], [], []>} : vector<2x32xbf16>, vector<32x128xbf16>, vector<2x128xf32> -> vector<2x128xf32>
      %c0_37 = arith.constant 0 : index
      %c0_38 = arith.constant 0 : index
      %48 = vector.load %arg7[%c0_37, %c0_38] : memref<1x128xf32, #tpu.memory_space<vmem>>, vector<1x128xf32>
      %49 = vector.broadcast %48 : vector<1x128xf32> to vector<2x128xf32>
      %50 = arith.addf %47, %49 : vector<2x128xf32>
      %c0_39 = arith.constant 0 : index
      %c0_40 = arith.constant 0 : index
      %51 = vector.load %arg8[%c0_39, %c0_40] : memref<2x128xf32, #tpu.memory_space<vmem>>, vector<2x128xf32>
      tpu.vector_store %arg8[%c0_39, %c0_40], %50 {strides = array<i32>} : memref<2x128xf32, #tpu.memory_space<vmem>>, vector<2x128xf32>,
    } else {
    }
    return
  }
  func.func @transform_0(%arg0: i32, %arg1: i32) -> (i32, i32, i32) {
    %c0_i32 = arith.constant 0 : i32
    %c0_i32_0 = arith.constant 0 : i32
    return %arg0, %arg1, %c0_i32 : i32, i32, i32
  }
  func.func @transform_1(%arg0: i32, %arg1: i32) -> (i32, i32, i32) {
    %c0_i32 = arith.constant 0 : i32
    %c0_i32_0 = arith.constant 0 : i32
    return %arg0, %arg1, %c0_i32 : i32, i32, i32
  }
  func.func @transform_2(%arg0: i32, %arg1: i32) -> (i32, i32) {
    %c0_i32 = arith.constant 0 : i32
    %c0_i32_0 = arith.constant 0 : i32
    %c0_i32_1 = arith.constant 0 : i32
    return %c0_i32, %c0_i32_0 : i32, i32
  }
  func.func @transform_3(%arg0: i32, %arg1: i32) -> (i32, i32) {
    %c0_i32 = arith.constant 0 : i32
    %c0_i32_0 = arith.constant 0 : i32
    %c0_i32_1 = arith.constant 0 : i32
    return %c0_i32, %c0_i32_0 : i32, i32
  }
  func.func @transform_4(%arg0: i32, %arg1: i32) -> (i32, i32) {
    %c0_i32 = arith.constant 0 : i32
    %c0_i32_0 = arith.constant 0 : i32
    %c0_i32_1 = arith.constant 0 : i32
    return %c0_i32, %c0_i32_0 : i32, i32
  }
  func.func @transform_5(%arg0: i32, %arg1: i32) -> (i32, i32) {
    %c0_i32 = arith.constant 0 : i32
    %c0_i32_0 = arith.constant 0 : i32
    %c0_i32_1 = arith.constant 0 : i32
    return %c0_i32, %c0_i32_0 : i32, i32
  }
  func.func @transform_6(%arg0: i32, %arg1: i32) -> (i32, i32) {
    %c0_i32 = arith.constant 0 : i32
    %c0_i32_0 = arith.constant 0 : i32
    return %arg0, %c0_i32 : i32, i32
  }
}

module attributes {stable_mosaic.version = 11 : i64} {
  func.func @_relation_head_kernel(%arg0: i32, %arg1: i32, %arg2: memref<2x8x32xf32, #tpu.memory_space<vmem>>, %arg3: memref<2x8x32xf32, #tpu.memory_space<vmem>>, %arg4: memref<96x32xbf16, #tpu.memory_space<vmem>>, %arg5: memref<1x32xf32, #tpu.memory_space<vmem>>, %arg6: memref<32x128xbf16, #tpu.memory_space<vmem>>, %arg7: memref<1x128xf32, #tpu.memory_space<vmem>>, %arg8: memref<2x128xf32, #tpu.memory_space<vmem>>, %arg9: memref<2x32xf32, #tpu.memory_space<vmem>>, %arg10: memref<2x32xf32, #tpu.memory_space<vmem>>) attributes {dimension_semantics = [#tpu.dimension_semantics<parallel>, #tpu.dimension_semantics<arbitrary>], iteration_bounds = array<i64: 1, 1>, scalar_prefetch = 0 : i64, scratch_operands = 2 : i64, tpu.core_type = #tpu.core_type<tc>, window_params = [{transform_indices = @transform_0, window_bounds = array<i64: 2, 8, 32>}, {transform_indices = @transform_1, window_bounds = array<i64: 2, 8, 32>}, {pipeline_mode = #tpu.pipeline_mode<synchronous>, transform_indices = @transform_2, window_bounds = array<i64: 96, 32>}, {pipeline_mode = #tpu.pipeline_mode<synchronous>, transform_indices = @transform_3, window_bounds = array<i64: 1, 32>}, {pipeline_mode = #tpu.pipeline_mode<synchronous>, transform_indices = @transform_4, window_bounds = array<i64: 32, 128>}, {pipeline_mode = #tpu.pipeline_mode<synchronous>, transform_indices = @transform_5, window_bounds = array<i64: 1, 128>}, {transform_indices = @transform_6, window_bounds = array<i64: 2, 128>}]} {
    %c0_i32 = arith.constant 0 : i32
    %0 = arith.cmpi eq, %arg1, %c0_i32 : i32
    %1 = arith.extui %0 : i1 to i32
    %c0_i32_0 = arith.constant 0 : i32
    %2 = arith.cmpi ne, %1, %c0_i32_0 : i32
    scf.if %2 {
      %cst_19 = arith.constant 0.000000e+00 : f32
      %22 = vector.broadcast %cst_19 : f32 to vector<2x32xf32>
      %c0_20 = arith.constant 0 : index
      %c0_21 = arith.constant 0 : index
      %23 = vector.load %arg9[%c0_20, %c0_21] : memref<2x32xf32, #tpu.memory_space<vmem>>, vector<2x32xf32>
      tpu.vector_store %arg9[%c0_20, %c0_21], %22 {strides = array<i32>} : memref<2x32xf32, #tpu.memory_space<vmem>>, vector<2x32xf32>,
      %cst_22 = arith.constant 0.000000e+00 : f32
      %24 = vector.broadcast %cst_22 : f32 to vector<2x32xf32>
      %c0_23 = arith.constant 0 : index
      %c0_24 = arith.constant 0 : index
      %25 = vector.load %arg10[%c0_23, %c0_24] : memref<2x32xf32, #tpu.memory_space<vmem>>, vector<2x32xf32>
      tpu.vector_store %arg10[%c0_23, %c0_24], %24 {strides = array<i32>} : memref<2x32xf32, #tpu.memory_space<vmem>>, vector<2x32xf32>,
    } else {
    }
    %c0_i32_1 = arith.constant 0 : i32
    %c8_i32 = arith.constant 8 : i32
    %3 = arith.muli %c0_i32_1, %c8_i32 : i32
    %4 = tpu.assume_multiple %3, 8 : i32
    %c0 = arith.constant 0 : index
    %c0_2 = arith.constant 0 : index
    %5 = vector.load %arg9[%c0, %c0_2] : memref<2x32xf32, #tpu.memory_space<vmem>>, vector<2x32xf32>
    %c0_3 = arith.constant 0 : index
    %6 = arith.index_cast %4 : i32 to index
    %c0_4 = arith.constant 0 : index
    %7 = vector.load %arg2[%c0_3, %6, %c0_4] : memref<2x8x32xf32, #tpu.memory_space<vmem>>, vector<2x8x32xf32>
    %cst = arith.constant dense<0.000000e+00> : vector<2x32xf32>
    %8 = vector.multi_reduction <add>, %7, %cst [1] : vector<2x8x32xf32> to vector<2x32xf32>
    %9 = arith.addf %5, %8 : vector<2x32xf32>
    %c0_5 = arith.constant 0 : index
    %c0_6 = arith.constant 0 : index
    %10 = vector.load %arg9[%c0_5, %c0_6] : memref<2x32xf32, #tpu.memory_space<vmem>>, vector<2x32xf32>
    tpu.vector_store %arg9[%c0_5, %c0_6], %9 {strides = array<i32>} : memref<2x32xf32, #tpu.memory_space<vmem>>, vector<2x32xf32>,
    %c1_i32 = arith.constant 1 : i32
    %c0_i32_7 = arith.constant 0 : i32
    %c8_i32_8 = arith.constant 8 : i32
    %11 = arith.muli %c0_i32_7, %c8_i32_8 : i32
    %12 = tpu.assume_multiple %11, 8 : i32
    %c0_9 = arith.constant 0 : index
    %c0_10 = arith.constant 0 : index
    %13 = vector.load %arg10[%c0_9, %c0_10] : memref<2x32xf32, #tpu.memory_space<vmem>>, vector<2x32xf32>
    %c0_11 = arith.constant 0 : index
    %14 = arith.index_cast %12 : i32 to index
    %c0_12 = arith.constant 0 : index
    %15 = vector.load %arg3[%c0_11, %14, %c0_12] : memref<2x8x32xf32, #tpu.memory_space<vmem>>, vector<2x8x32xf32>
    %cst_13 = arith.constant dense<0.000000e+00> : vector<2x32xf32>
    %16 = vector.multi_reduction <add>, %15, %cst_13 [1] : vector<2x8x32xf32> to vector<2x32xf32>
    %17 = arith.addf %13, %16 : vector<2x32xf32>
    %c0_14 = arith.constant 0 : index
    %c0_15 = arith.constant 0 : index
    %18 = vector.load %arg10[%c0_14, %c0_15] : memref<2x32xf32, #tpu.memory_space<vmem>>, vector<2x32xf32>
    tpu.vector_store %arg10[%c0_14, %c0_15], %17 {strides = array<i32>} : memref<2x32xf32, #tpu.memory_space<vmem>>, vector<2x32xf32>,
    %c1_i32_16 = arith.constant 1 : i32
    %c0_i32_17 = arith.constant 0 : i32
    %19 = arith.cmpi eq, %arg1, %c0_i32_17 : i32
    %20 = arith.extui %19 : i1 to i32
    %c0_i32_18 = arith.constant 0 : i32
    %21 = arith.cmpi ne, %20, %c0_i32_18 : i32
    scf.if %21 {
      %c0_19 = arith.constant 0 : index
      %c0_20 = arith.constant 0 : index
      %22 = vector.load %arg9[%c0_19, %c0_20] : memref<2x32xf32, #tpu.memory_space<vmem>>, vector<2x32xf32>
      %cst_21 = arith.constant 1.250000e-01 : f32
      %23 = vector.broadcast %cst_21 : f32 to vector<2x32xf32>
      %24 = arith.mulf %22, %23 : vector<2x32xf32>
      %c0_22 = arith.constant 0 : index
      %c0_23 = arith.constant 0 : index
      %25 = vector.load %arg10[%c0_22, %c0_23] : memref<2x32xf32, #tpu.memory_space<vmem>>, vector<2x32xf32>
      %cst_24 = arith.constant 1.250000e-01 : f32
      %26 = vector.broadcast %cst_24 : f32 to vector<2x32xf32>
      %27 = arith.mulf %25, %26 : vector<2x32xf32>
      %28 = arith.subf %24, %27 : vector<2x32xf32>
      %29 = math.absf %28 : vector<2x32xf32>
      %30 = arith.truncf %24 : vector<2x32xf32> to vector<2x32xbf16>
      %31 = arith.truncf %27 : vector<2x32xf32> to vector<2x32xbf16>
      %32 = arith.truncf %29 : vector<2x32xf32> to vector<2x32xbf16>
      %c0_25 = arith.constant 0 : index
      %c0_26 = arith.constant 0 : index
      %33 = vector.load %arg4[%c0_25, %c0_26] : memref<96x32xbf16, #tpu.memory_space<vmem>>, vector<32x32xbf16>
      %cst_27 = arith.constant dense<0.000000e+00> : vector<2x32xf32>
      %34 = tpu.matmul %30, %33, %cst_27 {dimension_numbers = #tpu.dot_dimension_numbers<[1], [0], [0], [1], [0, 0, 1, 1], [], []>} : vector<2x32xbf16>, vector<32x32xbf16>, vector<2x32xf32> -> vector<2x32xf32>
      %c32 = arith.constant 32 : index
      %c0_28 = arith.constant 0 : index
      %35 = vector.load %arg4[%c32, %c0_28] : memref<96x32xbf16, #tpu.memory_space<vmem>>, vector<32x32xbf16>
      %cst_29 = arith.constant dense<0.000000e+00> : vector<2x32xf32>
      %36 = tpu.matmul %31, %35, %cst_29 {dimension_numbers = #tpu.dot_dimension_numbers<[1], [0], [0], [1], [0, 0, 1, 1], [], []>} : vector<2x32xbf16>, vector<32x32xbf16>, vector<2x32xf32> -> vector<2x32xf32>
      %37 = arith.addf %34, %36 : vector<2x32xf32>
      %c64 = arith.constant 64 : index
      %c0_30 = arith.constant 0 : index
      %38 = vector.load %arg4[%c64, %c0_30] : memref<96x32xbf16, #tpu.memory_space<vmem>>, vector<32x32xbf16>
      %cst_31 = arith.constant dense<0.000000e+00> : vector<2x32xf32>
      %39 = tpu.matmul %32, %38, %cst_31 {dimension_numbers = #tpu.dot_dimension_numbers<[1], [0], [0], [1], [0, 0, 1, 1], [], []>} : vector<2x32xbf16>, vector<32x32xbf16>, vector<2x32xf32> -> vector<2x32xf32>
      %40 = arith.addf %37, %39 : vector<2x32xf32>
      %c0_32 = arith.constant 0 : index
      %c0_33 = arith.constant 0 : index
      %41 = vector.load %arg5[%c0_32, %c0_33] : memref<1x32xf32, #tpu.memory_space<vmem>>, vector<1x32xf32>
      %42 = vector.broadcast %41 : vector<1x32xf32> to vector<2x32xf32>
      %43 = arith.addf %40, %42 : vector<2x32xf32>
      %44 = math.tanh %43 : vector<2x32xf32>
      %45 = arith.truncf %44 : vector<2x32xf32> to vector<2x32xbf16>
      %c0_34 = arith.constant 0 : index
      %c0_35 = arith.constant 0 : index
      %46 = vector.load %arg6[%c0_34, %c0_35] : memref<32x128xbf16, #tpu.memory_space<vmem>>, vector<32x128xbf16>
      %cst_36 = arith.constant dense<0.000000e+00> : vector<2x128xf32>
      %47 = tpu.matmul %45, %46, %cst_36 {dimension_numbers = #tpu.dot_dimension_numbers<[1], [0], [0], [1], [0, 0, 1, 1], [], []>} : vector<2x32xbf16>, vector<32x128xbf16>, vector<2x128xf32> -> vector<2x128xf32>
      %c0_37 = arith.constant 0 : index
      %c0_38 = arith.constant 0 : index
      %48 = vector.load %arg7[%c0_37, %c0_38] : memref<1x128xf32, #tpu.memory_space<vmem>>, vector<1x128xf32>
      %49 = vector.broadcast %48 : vector<1x128xf32> to vector<2x128xf32>
      %50 = arith.addf %47, %49 : vector<2x128xf32>
      %c0_39 = arith.constant 0 : index
      %c0_40 = arith.constant 0 : index
      %51 = vector.load %arg8[%c0_39, %c0_40] : memref<2x128xf32, #tpu.memory_space<vmem>>, vector<2x128xf32>
      tpu.vector_store %arg8[%c0_39, %c0_40], %50 {strides = array<i32>} : memref<2x128xf32, #tpu.memory_space<vmem>>, vector<2x128xf32>,
    } else {
    }
    return
  }
  func.func @transform_0(%arg0: i32, %arg1: i32) -> (i32, i32, i32) {
    %c0_i32 = arith.constant 0 : i32
    %c0_i32_0 = arith.constant 0 : i32
    return %arg0, %arg1, %c0_i32 : i32, i32, i32
  }
  func.func @transform_1(%arg0: i32, %arg1: i32) -> (i32, i32, i32) {
    %c0_i32 = arith.constant 0 : i32
    %c0_i32_0 = arith.constant 0 : i32
    return %arg0, %arg1, %c0_i32 : i32, i32, i32
  }
  func.func @transform_2(%arg0: i32, %arg1: i32) -> (i32, i32) {
    %c0_i32 = arith.constant 0 : i32
    %c0_i32_0 = arith.constant 0 : i32
    %c0_i32_1 = arith.constant 0 : i32
    return %c0_i32, %c0_i32_0 : i32, i32
  }
  func.func @transform_3(%arg0: i32, %arg1: i32) -> (i32, i32) {
    %c0_i32 = arith.constant 0 : i32
    %c0_i32_0 = arith.constant 0 : i32
    %c0_i32_1 = arith.constant 0 : i32
    return %c0_i32, %c0_i32_0 : i32, i32
  }
  func.func @transform_4(%arg0: i32, %arg1: i32) -> (i32, i32) {
    %c0_i32 = arith.constant 0 : i32
    %c0_i32_0 = arith.constant 0 : i32
    %c0_i32_1 = arith.constant 0 : i32
    return %c0_i32, %c0_i32_0 : i32, i32
  }
  func.func @transform_5(%arg0: i32, %arg1: i32) -> (i32, i32) {
    %c0_i32 = arith.constant 0 : i32
    %c0_i32_0 = arith.constant 0 : i32
    %c0_i32_1 = arith.constant 0 : i32
    return %c0_i32, %c0_i32_0 : i32, i32
  }
  func.func @transform_6(%arg0: i32, %arg1: i32) -> (i32, i32) {
    %c0_i32 = arith.constant 0 : i32
    %c0_i32_0 = arith.constant 0 : i32
    return %arg0, %c0_i32 : i32, i32
  }
}

</mosaic_0001>

<llo_original>
// kernel: tpu_custom_call.1
$region0: #{tpu_custom_call.1}
  #allocation0 [shape = 'u32[]', space=smem, size = 0x4, offset = 0x4, fixed_abs, tag = 'smem constant byte address 0x4 - core index']
  #allocation1 [shape = 'u32[72,128]{1,0:T(1,128)}', space=vmem, size = 0x9000, scoped, tag = 'internal scratch']
  #allocation2 [shape = 'f32[2,32]{1,0:T(2,128)}', space=vmem, size = 0x400, scoped, tag = 'scratch operand']
  #allocation3 [shape = 'f32[2,32]{1,0:T(2,128)}', space=vmem, size = 0x400, scoped, tag = 'scratch operand']
  %s0 = inlined_call_operand.vmem [shape: f32[2,8,32], index: 0, kind: input, shape index: {}]
  %s1 = inlined_call_operand.vmem [shape: f32[2,8,32], index: 1, kind: input, shape index: {}]
  %s2 = inlined_call_operand.vmem [shape: bf16[96,32], index: 2, kind: input, shape index: {}]
  %s3 = inlined_call_operand.vmem [shape: f32[1,32], index: 3, kind: input, shape index: {}]
  %s4 = inlined_call_operand.vmem [shape: bf16[32,128], index: 4, kind: input, shape index: {}]
  %s5 = inlined_call_operand.vmem [shape: f32[1,128], index: 5, kind: input, shape index: {}]
  %s6 = inlined_call_operand.hbm [shape: f32[2,128], index: 6, kind: output, shape index: {}]
  %s7 = sld [smem:[#allocation0]]
  $region42: #{tpu_custom_call.1} parent=0
    _
  %s9 = ssub.s32 1, %s7
  %s10 = scalar_select 0, %s9, %s7
  $region1: #{tpu_custom_call.1} parent=0
    #allocation4 [shape = 'u8[1024]{0}', space=vmem, size = 0x400, scoped, tag = 'output window, operand 0, single buffered']
    #allocation5 [shape = 's32[1]{0}', space=sflag, size = 0x4, scoped, tag = 'scoped memory for tpu_custom_call.1']
    %11 = vsyncpa [#allocation5], 0
    // Predicated region
    $region2: #{tpu_custom_call.1} parent=1 // pred_check
      _
    $region3: #{tpu_custom_call.1} parent=1 // pred_check_branch
      %13 = sbr.rel (0) target = $region5
    $region4: #{tpu_custom_call.1} parent=1 // pred_region
      _
    $region5: #{tpu_custom_call.1} parent=1 // pred_fallthru
      _
    // Predicated region
    $region6: #{tpu_custom_call.1} parent=1 // pred_check
      _
    $region7: #{tpu_custom_call.1} parent=1 // pred_check_branch
      %15 = sbr.rel (0) target = $region9
    $region8: #{tpu_custom_call.1} parent=1 // pred_region
      _
    $region9: #{tpu_custom_call.1} parent=1 // pred_fallthru
      _
    // Predicated region
    $region10: #{tpu_custom_call.1} parent=1 // pred_check
      _
    $region11: #{tpu_custom_call.1} parent=1 // pred_check_branch
      %17 = sbr.rel (0) target = $region13
    $region12: #{tpu_custom_call.1} parent=1 // pred_region
      _
    $region13: #{tpu_custom_call.1} parent=1 // pred_fallthru
      _
    // Predicated region
    $region14: #{tpu_custom_call.1} parent=1 // pred_check
      _
    $region15: #{tpu_custom_call.1} parent=1 // pred_check_branch
      %19 = sbr.rel (0) target = $region17
    $region16: #{tpu_custom_call.1} parent=1 // pred_region
      _
    $region17: #{tpu_custom_call.1} parent=1 // pred_fallthru
      _
    // Predicated region
    $region18: #{tpu_custom_call.1} parent=1 // pred_check
      _
    $region19: #{tpu_custom_call.1} parent=1 // pred_check_branch
      %21 = sbr.rel (0) target = $region21
    $region20: #{tpu_custom_call.1} parent=1 // pred_region
      _
    $region21: #{tpu_custom_call.1} parent=1 // pred_fallthru
      _
    // Predicated region
    $region22: #{tpu_custom_call.1} parent=1 // pred_check
      _
    $region23: #{tpu_custom_call.1} parent=1 // pred_check_branch
      %23 = sbr.rel (0) target = $region25
    $region24: #{tpu_custom_call.1} parent=1 // pred_region
      _
    $region25: #{tpu_custom_call.1} parent=1 // pred_fallthru
      _
    %p25 = scmp.eq.s32.totalorder 0, 0
    // Predicated region
    $region26: #{tpu_custom_call.1} parent=1 // pred_check
      %p26 = pneg %p25
    $region27: #{tpu_custom_call.1} parent=1 // pred_check_branch
      %28 = sbr.rel (%p26) target = $region29
    $region28: #{tpu_custom_call.1} parent=1 // pred_region
      %vm29 = vcmask 254976
      %30 = vst.msk [vmem:[#allocation2] sm:$0x3] %vm29, 0.0
      %31 = vst.msk [vmem:[#allocation3] sm:$0x3] %vm29, 0.0
    $region29: #{tpu_custom_call.1} parent=1 // pred_fallthru
      _
    %v32 = vld [vmem:[#allocation2] sm:$0x3]
    %v33 = vld [vmem:[%s0] sm:$0xff]
    %v34 = vld [vmem:[%s0 + $0x8] sm:$0xff]
    %vm35 = vcmask 261120
    %v36 = vsel %vm35, %v33, 0.0
    %v37 = vrot.slane %v36, 4
    %v38 = vadd.f32 %v36, %v37
    %v39 = vrot.slane %v38, 2
    %v40 = vadd.f32 %v38, %v39
    %v41 = vrot.slane %v40, 1
    %v42 = vadd.f32 %v40, %v41
    %v43 = vsel %vm35, %v34, 0.0
    %v44 = vrot.slane %v43, 4
    %v45 = vadd.f32 %v43, %v44
    %v46 = vrot.slane %v45, 2
    %v47 = vadd.f32 %v45, %v46
    %v48 = vrot.slane %v47, 1
    %v49 = vadd.f32 %v47, %v48
    %vm52 = vcmask 1041409
    %v53 = vsel %vm52, %v49, %v42
    %v55 = vadd.f32 %v32, %v53
    %vm56 = vcmask 254976
    %57 = vst.msk [vmem:[#allocation2] sm:$0x3] %vm56, %v55
    %v58 = vld [vmem:[#allocation3] sm:$0x3]
    %v59 = vld [vmem:[%s1] sm:$0xff]
    %v60 = vld [vmem:[%s1 + $0x8] sm:$0xff]
    %v61 = vsel %vm35, %v59, 0.0
    %v62 = vrot.slane %v61, 4
    %v63 = vadd.f32 %v61, %v62
    %v64 = vrot.slane %v63, 2
    %v65 = vadd.f32 %v63, %v64
    %v66 = vrot.slane %v65, 1
    %v67 = vadd.f32 %v65, %v66
    %v68 = vsel %vm35, %v60, 0.0
    %v69 = vrot.slane %v68, 4
    %v70 = vadd.f32 %v68, %v69
    %v71 = vrot.slane %v70, 2
    %v72 = vadd.f32 %v70, %v71
    %v73 = vrot.slane %v72, 1
    %v74 = vadd.f32 %v72, %v73
    %v77 = vsel %vm52, %v74, %v67
    %v79 = vadd.f32 %v58, %v77
    %80 = vst.msk [vmem:[#allocation3] sm:$0x3] %vm56, %v79
    // Predicated region
    $region30: #{tpu_custom_call.1} parent=1 // pred_check
      %p81 = pneg %p25
    $region31: #{tpu_custom_call.1} parent=1 // pred_check_branch
      %83 = sbr.rel (%p81) target = $region33
    $region32: #{tpu_custom_call.1} parent=1 // pred_region
      %v84 = vld [vmem:[#allocation2] sm:$0x3]
      %v85 = vmul.f32 %v84, 0.125
      %v86 = vld [vmem:[#allocation3] sm:$0x3]
      %v87 = vmul.f32 %v86, 0.125
      %v88 = vsub.f32 %v85, %v87
      %v89 = vand.u32 2147483647, %v88
      %v90 = vpack.c.bf16 %v85, %v85
      %v91 = vpack.c.bf16 %v87, %v87
      %v92 = vpack.c.bf16 %v89, %v89
      %v93 = vld [vmem:[%s2] sm:$0xf]
      %v94 = vld [vmem:[%s2 + $0x4] sm:$0xf]
      %v95 = vld [vmem:[%s2 + $0x8] sm:$0xf]
      %v96 = vld [vmem:[%s2 + $0xc] sm:$0xf]
      %v97 = vld [vmem:[%s2 + $0x10] sm:$0xf]
      %v98 = vld [vmem:[%s2 + $0x14] sm:$0xf]
      %v99 = vld [vmem:[%s2 + $0x18] sm:$0xf]
      %v100 = vld [vmem:[%s2 + $0x1c] sm:$0xf]
      %v105 = vunpack.c.l.b16 %v97
      %v106 = vunpack.c.l.b16 %v98
      %v107 = vunpack.c.l.b16 %v99
      %v108 = vunpack.c.l.b16 %v100
      %v109 = vpack.c.b16 %v106, %v105
      %v110 = vpack.c.b16 %v108, %v107
      %v114 = vsel %vm35, %v91, 0
      %116 = vmatpush.bf16.msra.mxu0 0
      %117 = vmatpush.bf16.msra.mxu0 0
      %118 = vmatpush.bf16.msra.mxu0 0
      %119 = vmatpush.bf16.msra.mxu0 0
      %120 = vmatpush.bf16.msra.mxu0 0
      %121 = vmatpush.bf16.msra.mxu0 0
      %122 = vmatpush.bf16.msra.mxu0 %v110
      %123 = vmatpush.bf16.msra.mxu0 %v109
      %124 = vmatmul.bf16.gmra.mxu0 %v114
      %v125 = vpop.f32.mrf.mxu0
      %v126 = vadd.f32 0.0, %v125
      %v127 = vpop.f32.mrf.mxu0
      %128 = vdwg.mxu0
      %v133 = vunpack.c.l.b16 %v93
      %v134 = vunpack.c.l.b16 %v94
      %v135 = vunpack.c.l.b16 %v95
      %v136 = vunpack.c.l.b16 %v96
      %v137 = vpack.c.b16 %v134, %v133
      %v138 = vpack.c.b16 %v136, %v135
      %v142 = vsel %vm35, %v90, 0
      %144 = vmatpush.bf16.msra.mxu0 0
      %145 = vmatpush.bf16.msra.mxu0 0
      %146 = vmatpush.bf16.msra.mxu0 0
      %147 = vmatpush.bf16.msra.mxu0 0
      %148 = vmatpush.bf16.msra.mxu0 0
      %149 = vmatpush.bf16.msra.mxu0 0
      %150 = vmatpush.bf16.msra.mxu0 %v138
      %151 = vmatpush.bf16.msra.mxu0 %v137
      %152 = vmatmul.bf16.gmra.mxu0 %v142
      %v153 = vpop.f32.mrf.mxu0
      %v154 = vadd.f32 %v126, %v153
      %v155 = vpop.f32.mrf.mxu0
      %156 = vdwg.mxu0
      %v157 = vld [vmem:[%s2 + $0x20] sm:$0xf]
      %v158 = vld [vmem:[%s2 + $0x24] sm:$0xf]
      %v159 = vld [vmem:[%s2 + $0x28] sm:$0xf]
      %v160 = vld [vmem:[%s2 + $0x2c] sm:$0xf]
      %v165 = vunpack.c.l.b16 %v157
      %v166 = vunpack.c.l.b16 %v158
      %v167 = vunpack.c.l.b16 %v159
      %v168 = vunpack.c.l.b16 %v160
      %v169 = vpack.c.b16 %v166, %v165
      %v170 = vpack.c.b16 %v168, %v167
      %v174 = vsel %vm35, %v92, 0
      %176 = vmatpush.bf16.msra.mxu0 0
      %177 = vmatpush.bf16.msra.mxu0 0
      %178 = vmatpush.bf16.msra.mxu0 0
      %179 = vmatpush.bf16.msra.mxu0 0
      %180 = vmatpush.bf16.msra.mxu0 0
      %181 = vmatpush.bf16.msra.mxu0 0
      %182 = vmatpush.bf16.msra.mxu0 %v170
      %183 = vmatpush.bf16.msra.mxu0 %v169
      %184 = vmatmul.bf16.gmra.mxu0 %v174
      %v185 = vpop.f32.mrf.mxu0
      %v186 = vadd.f32 0.0, %v185
      %v187 = vpop.f32.mrf.mxu0
      %188 = vdwg.mxu0
      %v189 = vadd.f32 %v154, %v186
      %v190 = vld [vmem:[%s3] sm:$0x1]
      %v192 = vperm.slane %v190, 0
      %v194 = vadd.f32 %v189, %v192
      %v195 = vtanh.pop %v194
      %v196 = vpack.c.bf16 %v195, %v195
      %v197 = vld [vmem:[%s4] sm:$0xf]
      %v198 = vld [vmem:[%s4 + $0x4] sm:$0xf]
      %v199 = vld [vmem:[%s4 + $0x8] sm:$0xf]
      %v200 = vld [vmem:[%s4 + $0xc] sm:$0xf]
      %v201 = vld [vmem:[%s5] sm:$0x1]
      %v203 = vperm.slane %v201, 0
      %v209 = vunpack.c.l.b16 %v197
      %v210 = vunpack.c.l.b16 %v198
      %v211 = vunpack.c.l.b16 %v199
      %v212 = vunpack.c.l.b16 %v200
      %v213 = vpack.c.b16 %v210, %v209
      %v214 = vpack.c.b16 %v212, %v211
      %v218 = vsel %vm35, %v196, 0
      %220 = vmatpush.bf16.msra.mxu0 0
      %221 = vmatpush.bf16.msra.mxu0 0
      %222 = vmatpush.bf16.msra.mxu0 0
      %223 = vmatpush.bf16.msra.mxu0 0
      %224 = vmatpush.bf16.msra.mxu0 0
      %225 = vmatpush.bf16.msra.mxu0 0
      %226 = vmatpush.bf16.msra.mxu0 %v214
      %227 = vmatpush.bf16.msra.mxu0 %v213
      %228 = vmatmul.bf16.gmra.mxu0 %v218
      %v229 = vpop.f32.mrf.mxu0
      %v230 = vadd.f32 %v203, %v229
      %v231 = vpop.f32.mrf.mxu0
      %232 = vdwg.mxu0
      %233 = vst [vmem:[#allocation4] sm:$0x3] %v230
    $region33: #{tpu_custom_call.1} parent=1 // pred_fallthru
      _
    // Predicated region
    $region34: #{tpu_custom_call.1} parent=1 // pred_check
      _
    $region35: #{tpu_custom_call.1} parent=1 // pred_check_branch
      %235 = sbr.rel (0) target = $region37
    $region36: #{tpu_custom_call.1} parent=1 // pred_region
      %237 = vsyncadd [#allocation5], 0
      %s239 = sshll.u32 [#allocation4], 4
      %s240 = int_to_ptr.vmem [resolvable:$true] %s239
      %s241 = sshll.u32 %s6, 4
      %s242 = int_to_ptr.hbm [resolvable:$true] %s241
      %244 = dma.vmem_to_hbm [thread:$0]  %s240, 32, %s242, [#allocation5]
    $region37: #{tpu_custom_call.1} parent=1 // pred_fallthru
      _
    // Predicated region
    $region38: #{tpu_custom_call.1} parent=1 // pred_check
      _
    $region39: #{tpu_custom_call.1} parent=1 // pred_check_branch
      %246 = sbr.rel (0) target = $region41
    $region40: #{tpu_custom_call.1} parent=1 // pred_region
      %248 = dma.done [#allocation5], 32
    $region41: #{tpu_custom_call.1} parent=1 // pred_fallthru
      _
    %249 = vsyncpa [#allocation5], 1

// kernel: tpu_custom_call.1
$region0: #{tpu_custom_call.1}
  #allocation0 [shape = 'u32[]', space=smem, size = 0x4, offset = 0x4, fixed_abs, tag = 'smem constant byte address 0x4 - core index']
  #allocation1 [shape = 'u32[72,128]{1,0:T(1,128)}', space=vmem, size = 0x9000, scoped, tag = 'internal scratch']
  #allocation2 [shape = 'f32[2,32]{1,0:T(2,128)}', space=vmem, size = 0x400, scoped, tag = 'scratch operand']
  #allocation3 [shape = 'f32[2,32]{1,0:T(2,128)}', space=vmem, size = 0x400, scoped, tag = 'scratch operand']
  %s0 = inlined_call_operand.vmem [shape: f32[2,8,32], index: 0, kind: input, shape index: {}]
  %s1 = inlined_call_operand.vmem [shape: f32[2,8,32], index: 1, kind: input, shape index: {}]
  %s2 = inlined_call_operand.vmem [shape: bf16[96,32], index: 2, kind: input, shape index: {}]
  %s3 = inlined_call_operand.vmem [shape: f32[1,32], index: 3, kind: input, shape index: {}]
  %s4 = inlined_call_operand.vmem [shape: bf16[32,128], index: 4, kind: input, shape index: {}]
  %s5 = inlined_call_operand.vmem [shape: f32[1,128], index: 5, kind: input, shape index: {}]
  %s6 = inlined_call_operand.hbm [shape: f32[2,128], index: 6, kind: output, shape index: {}]
  %s7 = sld [smem:[#allocation0]]
  $region42: #{tpu_custom_call.1} parent=0
    _
  %s9 = ssub.s32 1, %s7
  %s10 = scalar_select 0, %s9, %s7
  $region1: #{tpu_custom_call.1} parent=0
    #allocation4 [shape = 'u8[1024]{0}', space=vmem, size = 0x400, scoped, tag = 'output window, operand 0, single buffered']
    #allocation5 [shape = 's32[1]{0}', space=sflag, size = 0x4, scoped, tag = 'scoped memory for tpu_custom_call.1']
    %11 = vsyncpa [#allocation5], 0
    // Predicated region
    $region2: #{tpu_custom_call.1} parent=1 // pred_check
      _
    $region3: #{tpu_custom_call.1} parent=1 // pred_check_branch
      %13 = sbr.rel (0) target = $region5
    $region4: #{tpu_custom_call.1} parent=1 // pred_region
      _
    $region5: #{tpu_custom_call.1} parent=1 // pred_fallthru
      _
    // Predicated region
    $region6: #{tpu_custom_call.1} parent=1 // pred_check
      _
    $region7: #{tpu_custom_call.1} parent=1 // pred_check_branch
      %15 = sbr.rel (0) target = $region9
    $region8: #{tpu_custom_call.1} parent=1 // pred_region
      _
    $region9: #{tpu_custom_call.1} parent=1 // pred_fallthru
      _
    // Predicated region
    $region10: #{tpu_custom_call.1} parent=1 // pred_check
      _
    $region11: #{tpu_custom_call.1} parent=1 // pred_check_branch
      %17 = sbr.rel (0) target = $region13
    $region12: #{tpu_custom_call.1} parent=1 // pred_region
      _
    $region13: #{tpu_custom_call.1} parent=1 // pred_fallthru
      _
    // Predicated region
    $region14: #{tpu_custom_call.1} parent=1 // pred_check
      _
    $region15: #{tpu_custom_call.1} parent=1 // pred_check_branch
      %19 = sbr.rel (0) target = $region17
    $region16: #{tpu_custom_call.1} parent=1 // pred_region
      _
    $region17: #{tpu_custom_call.1} parent=1 // pred_fallthru
      _
    // Predicated region
    $region18: #{tpu_custom_call.1} parent=1 // pred_check
      _
    $region19: #{tpu_custom_call.1} parent=1 // pred_check_branch
      %21 = sbr.rel (0) target = $region21
    $region20: #{tpu_custom_call.1} parent=1 // pred_region
      _
    $region21: #{tpu_custom_call.1} parent=1 // pred_fallthru
      _
    // Predicated region
    $region22: #{tpu_custom_call.1} parent=1 // pred_check
      _
    $region23: #{tpu_custom_call.1} parent=1 // pred_check_branch
      %23 = sbr.rel (0) target = $region25
    $region24: #{tpu_custom_call.1} parent=1 // pred_region
      _
    $region25: #{tpu_custom_call.1} parent=1 // pred_fallthru
      _
    %p25 = scmp.eq.s32.totalorder 0, 0
    // Predicated region
    $region26: #{tpu_custom_call.1} parent=1 // pred_check
      %p26 = pneg %p25
    $region27: #{tpu_custom_call.1} parent=1 // pred_check_branch
      %28 = sbr.rel (%p26) target = $region29
    $region28: #{tpu_custom_call.1} parent=1 // pred_region
      %vm29 = vcmask 254976
      %30 = vst.msk [vmem:[#allocation2] sm:$0x3] %vm29, 0.0
      %31 = vst.msk [vmem:[#allocation3] sm:$0x3] %vm29, 0.0
    $region29: #{tpu_custom_call.1} parent=1 // pred_fallthru
      _
    %v32 = vld [vmem:[#allocation2] sm:$0x3]
    %v33 = vld [vmem:[%s0] sm:$0xff]
    %v34 = vld [vmem:[%s0 + $0x8] sm:$0xff]
    %vm35 = vcmask 261120
    %v36 = vsel %vm35, %v33, 0.0
    %v37 = vrot.slane %v36, 4
    %v38 = vadd.f32 %v36, %v37
    %v39 = vrot.slane %v38, 2
    %v40 = vadd.f32 %v38, %v39
    %v41 = vrot.slane %v40, 1
    %v42 = vadd.f32 %v40, %v41
    %v43 = vsel %vm35, %v34, 0.0
    %v44 = vrot.slane %v43, 4
    %v45 = vadd.f32 %v43, %v44
    %v46 = vrot.slane %v45, 2
    %v47 = vadd.f32 %v45, %v46
    %v48 = vrot.slane %v47, 1
    %v49 = vadd.f32 %v47, %v48
    %vm52 = vcmask 1041409
    %v53 = vsel %vm52, %v49, %v42
    %v55 = vadd.f32 %v32, %v53
    %vm56 = vcmask 254976
    %57 = vst.msk [vmem:[#allocation2] sm:$0x3] %vm56, %v55
    %v58 = vld [vmem:[#allocation3] sm:$0x3]
    %v59 = vld [vmem:[%s1] sm:$0xff]
    %v60 = vld [vmem:[%s1 + $0x8] sm:$0xff]
    %v61 = vsel %vm35, %v59, 0.0
    %v62 = vrot.slane %v61, 4
    %v63 = vadd.f32 %v61, %v62
    %v64 = vrot.slane %v63, 2
    %v65 = vadd.f32 %v63, %v64
    %v66 = vrot.slane %v65, 1
    %v67 = vadd.f32 %v65, %v66
    %v68 = vsel %vm35, %v60, 0.0
    %v69 = vrot.slane %v68, 4
    %v70 = vadd.f32 %v68, %v69
    %v71 = vrot.slane %v70, 2
    %v72 = vadd.f32 %v70, %v71
    %v73 = vrot.slane %v72, 1
    %v74 = vadd.f32 %v72, %v73
    %v77 = vsel %vm52, %v74, %v67
    %v79 = vadd.f32 %v58, %v77
    %80 = vst.msk [vmem:[#allocation3] sm:$0x3] %vm56, %v79
    // Predicated region
    $region30: #{tpu_custom_call.1} parent=1 // pred_check
      %p81 = pneg %p25
    $region31: #{tpu_custom_call.1} parent=1 // pred_check_branch
      %83 = sbr.rel (%p81) target = $region33
    $region32: #{tpu_custom_call.1} parent=1 // pred_region
      %v84 = vld [vmem:[#allocation2] sm:$0x3]
      %v85 = vmul.f32 %v84, 0.125
      %v86 = vld [vmem:[#allocation3] sm:$0x3]
      %v87 = vmul.f32 %v86, 0.125
      %v88 = vsub.f32 %v85, %v87
      %v89 = vand.u32 2147483647, %v88
      %v90 = vpack.c.bf16 %v85, %v85
      %v91 = vpack.c.bf16 %v87, %v87
      %v92 = vpack.c.bf16 %v89, %v89
      %v93 = vld [vmem:[%s2] sm:$0xf]
      %v94 = vld [vmem:[%s2 + $0x4] sm:$0xf]
      %v95 = vld [vmem:[%s2 + $0x8] sm:$0xf]
      %v96 = vld [vmem:[%s2 + $0xc] sm:$0xf]
      %v97 = vld [vmem:[%s2 + $0x10] sm:$0xf]
      %v98 = vld [vmem:[%s2 + $0x14] sm:$0xf]
      %v99 = vld [vmem:[%s2 + $0x18] sm:$0xf]
      %v100 = vld [vmem:[%s2 + $0x1c] sm:$0xf]
      %v105 = vunpack.c.l.b16 %v97
      %v106 = vunpack.c.l.b16 %v98
      %v107 = vunpack.c.l.b16 %v99
      %v108 = vunpack.c.l.b16 %v100
      %v109 = vpack.c.b16 %v106, %v105
      %v110 = vpack.c.b16 %v108, %v107
      %v114 = vsel %vm35, %v91, 0
      %116 = vmatpush.bf16.msra.mxu0 0
      %117 = vmatpush.bf16.msra.mxu0 0
      %118 = vmatpush.bf16.msra.mxu0 0
      %119 = vmatpush.bf16.msra.mxu0 0
      %120 = vmatpush.bf16.msra.mxu0 0
      %121 = vmatpush.bf16.msra.mxu0 0
      %122 = vmatpush.bf16.msra.mxu0 %v110
      %123 = vmatpush.bf16.msra.mxu0 %v109
      %124 = vmatmul.bf16.gmra.mxu0 %v114
      %v125 = vpop.f32.mrf.mxu0
      %v126 = vadd.f32 0.0, %v125
      %v127 = vpop.f32.mrf.mxu0
      %128 = vdwg.mxu0
      %v133 = vunpack.c.l.b16 %v93
      %v134 = vunpack.c.l.b16 %v94
      %v135 = vunpack.c.l.b16 %v95
      %v136 = vunpack.c.l.b16 %v96
      %v137 = vpack.c.b16 %v134, %v133
      %v138 = vpack.c.b16 %v136, %v135
      %v142 = vsel %vm35, %v90, 0
      %144 = vmatpush.bf16.msra.mxu0 0
      %145 = vmatpush.bf16.msra.mxu0 0
      %146 = vmatpush.bf16.msra.mxu0 0
      %147 = vmatpush.bf16.msra.mxu0 0
      %148 = vmatpush.bf16.msra.mxu0 0
      %149 = vmatpush.bf16.msra.mxu0 0
      %150 = vmatpush.bf16.msra.mxu0 %v138
      %151 = vmatpush.bf16.msra.mxu0 %v137
      %152 = vmatmul.bf16.gmra.mxu0 %v142
      %v153 = vpop.f32.mrf.mxu0
      %v154 = vadd.f32 %v126, %v153
      %v155 = vpop.f32.mrf.mxu0
      %156 = vdwg.mxu0
      %v157 = vld [vmem:[%s2 + $0x20] sm:$0xf]
      %v158 = vld [vmem:[%s2 + $0x24] sm:$0xf]
      %v159 = vld [vmem:[%s2 + $0x28] sm:$0xf]
      %v160 = vld [vmem:[%s2 + $0x2c] sm:$0xf]
      %v165 = vunpack.c.l.b16 %v157
      %v166 = vunpack.c.l.b16 %v158
      %v167 = vunpack.c.l.b16 %v159
      %v168 = vunpack.c.l.b16 %v160
      %v169 = vpack.c.b16 %v166, %v165
      %v170 = vpack.c.b16 %v168, %v167
      %v174 = vsel %vm35, %v92, 0
      %176 = vmatpush.bf16.msra.mxu0 0
      %177 = vmatpush.bf16.msra.mxu0 0
      %178 = vmatpush.bf16.msra.mxu0 0
      %179 = vmatpush.bf16.msra.mxu0 0
      %180 = vmatpush.bf16.msra.mxu0 0
      %181 = vmatpush.bf16.msra.mxu0 0
      %182 = vmatpush.bf16.msra.mxu0 %v170
      %183 = vmatpush.bf16.msra.mxu0 %v169
      %184 = vmatmul.bf16.gmra.mxu0 %v174
      %v185 = vpop.f32.mrf.mxu0
      %v186 = vadd.f32 0.0, %v185
      %v187 = vpop.f32.mrf.mxu0
      %188 = vdwg.mxu0
      %v189 = vadd.f32 %v154, %v186
      %v190 = vld [vmem:[%s3] sm:$0x1]
      %v192 = vperm.slane %v190, 0
      %v194 = vadd.f32 %v189, %v192
      %v195 = vtanh.pop %v194
      %v196 = vpack.c.bf16 %v195, %v195
      %v197 = vld [vmem:[%s4] sm:$0xf]
      %v198 = vld [vmem:[%s4 + $0x4] sm:$0xf]
      %v199 = vld [vmem:[%s4 + $0x8] sm:$0xf]
      %v200 = vld [vmem:[%s4 + $0xc] sm:$0xf]
      %v201 = vld [vmem:[%s5] sm:$0x1]
      %v203 = vperm.slane %v201, 0
      %v209 = vunpack.c.l.b16 %v197
      %v210 = vunpack.c.l.b16 %v198
      %v211 = vunpack.c.l.b16 %v199
      %v212 = vunpack.c.l.b16 %v200
      %v213 = vpack.c.b16 %v210, %v209
      %v214 = vpack.c.b16 %v212, %v211
      %v218 = vsel %vm35, %v196, 0
      %220 = vmatpush.bf16.msra.mxu0 0
      %221 = vmatpush.bf16.msra.mxu0 0
      %222 = vmatpush.bf16.msra.mxu0 0
      %223 = vmatpush.bf16.msra.mxu0 0
      %224 = vmatpush.bf16.msra.mxu0 0
      %225 = vmatpush.bf16.msra.mxu0 0
      %226 = vmatpush.bf16.msra.mxu0 %v214
      %227 = vmatpush.bf16.msra.mxu0 %v213
      %228 = vmatmul.bf16.gmra.mxu0 %v218
      %v229 = vpop.f32.mrf.mxu0
      %v230 = vadd.f32 %v203, %v229
      %v231 = vpop.f32.mrf.mxu0
      %232 = vdwg.mxu0
      %233 = vst [vmem:[#allocation4] sm:$0x3] %v230
    $region33: #{tpu_custom_call.1} parent=1 // pred_fallthru
      _
    // Predicated region
    $region34: #{tpu_custom_call.1} parent=1 // pred_check
      _
    $region35: #{tpu_custom_call.1} parent=1 // pred_check_branch
      %235 = sbr.rel (0) target = $region37
    $region36: #{tpu_custom_call.1} parent=1 // pred_region
      %237 = vsyncadd [#allocation5], 0
      %s239 = sshll.u32 [#allocation4], 4
      %s240 = int_to_ptr.vmem [resolvable:$true] %s239
      %s241 = sshll.u32 %s6, 4
      %s242 = int_to_ptr.hbm [resolvable:$true] %s241
      %244 = dma.vmem_to_hbm [thread:$0]  %s240, 32, %s242, [#allocation5]
    $region37: #{tpu_custom_call.1} parent=1 // pred_fallthru
      _
    // Predicated region
    $region38: #{tpu_custom_call.1} parent=1 // pred_check
      _
    $region39: #{tpu_custom_call.1} parent=1 // pred_check_branch
      %246 = sbr.rel (0) target = $region41
    $region40: #{tpu_custom_call.1} parent=1 // pred_region
      %248 = dma.done [#allocation5], 32
    $region41: #{tpu_custom_call.1} parent=1 // pred_fallthru
      _
    %249 = vsyncpa [#allocation5], 1

</llo_original>
